<compile_context>
chip_gen: v5e
topology: v5e:2x2
jax: 0.10.0
libtpu: 0.0.40
codegen_flags: <defaults>
</compile_context>

<pallas_src>
import functools

import jax
import jax.numpy as jnp
from jax import lax
from jax.experimental import pallas as pl
from jax.experimental.pallas import tpu as pltpu

SELU_ALPHA = 1.6732632423543772848170429916717
SELU_SCALE = 1.0507009873554804934193349852946
BN_EPS = 1e-5
K = 5      # kernel_size
PAD = 2    # padding

# MXU operand dtype for the two convolutions (accumulation is always f32).
# Set to jnp.float32 to recover ~1e-3 agreement with the exact f32 module.
CONV_MXU_DTYPE = jnp.bfloat16


def _selu(v):
    return SELU_SCALE * jnp.where(v > 0, v, SELU_ALPHA * (jnp.exp(v) - 1.0))


def encoder_block_kernel(xcat_ref, m1_ref, b1_ref, m2_ref, b2_ref,
                         g_ref, beta_ref, swcat_ref, rcat_ref,
                         x_out_ref, p_out_ref, y1h_ref, *, cout, inv_count):
    N, Hp, WC = y1h_ref.shape
    H = Hp - 2 * PAD
    NH = N * H
    NHo = NH // 2
    WoC = WC // 2

    # ---- conv1: all K h-taps fused into ONE bf16 MXU matmul (contraction K*W*Cin).
    #      The im2col LHS and the band matrix were prepared (and cast) once in the wrapper.
    y1 = jnp.dot(xcat_ref[...], m1_ref[...],
                 preferred_element_type=jnp.float32) + b1_ref[...]        # (NH, WC) f32

    # ---- H-padded conv1 output in VMEM scratch (W 'same' padding is baked into the band
    #      matrices); borders zeroed, interior written with one dense 128-lane store. ----
    zero_rows = jnp.zeros((N, PAD, WC), jnp.float32)
    y1h_ref[:, 0:PAD, :] = zero_rows
    y1h_ref[:, PAD + H:Hp, :] = zero_rows
    y1h_ref[:, PAD:PAD + H, :] = y1.reshape(N, H, WC)

    # ---- conv2: the K shifted h-slabs are concatenated along lanes so the whole conv is
    #      again ONE bf16 MXU matmul (contraction K*W*Cout). ----
    lhs2 = jnp.concatenate(
        [y1h_ref[:, dy:dy + H, :].reshape(NH, WC) for dy in range(K)], axis=1)
    z = jnp.dot(lhs2.astype(CONV_MXU_DTYPE), m2_ref[...],
                preferred_element_type=jnp.float32) + b2_ref[...]         # (NH, WC) f32

    # ---- SELU applied twice (conv_block.forward with activ=True), f32 on the VPU/EUP. ----
    z = _selu(_selu(z))

    # ---- BatchNorm2d with training-mode batch statistics (biased variance).
    #      Reduce over rows first, then all-reduce the W groups of the merged (w, c) lane
    #      axis with a log2(W) lane-rotation butterfly (shifts are multiples of cout, so the
    #      channel phase is preserved and the rotation direction is irrelevant). ----
    sum_l = jnp.sum(z, axis=0, keepdims=True)                             # (1, WC)
    sq_l = jnp.sum(z * z, axis=0, keepdims=True)                          # (1, WC)
    s = WC // 2
    while s >= cout:
        sum_l = sum_l + pltpu.roll(sum_l, s, axis=1)
        sq_l = sq_l + pltpu.roll(sq_l, s, axis=1)
        s //= 2
    mean_l = sum_l * inv_count                                            # per-channel mean
    var_l = sq_l * inv_count - mean_l * mean_l                            # biased batch var
    inv_l = lax.rsqrt(var_l + BN_EPS)
    xbn = (z - mean_l) * (inv_l * g_ref[...]) + beta_ref[...]
    x_out_ref[...] = xbn                                                  # lane-dense store
    # TODO(synk): running_mean/running_var momentum-buffer updates (module state) not emitted.

    # ---- MaxPool2d(2, 2) on the in-register BN output:
    #      h-pairs: one fused 0/1 row-selection matmul, halves are 8-aligned sublane slices;
    #      w-pairs: one fused 0/1 column-selection matmul, then a half-width lane roll
    #               (shift = width/2, direction-agnostic) so the max lands in every lane
    #               -> one unmasked 128-lane-dense store; wrapper keeps lanes [:WoC]. ----
    hm = jnp.dot(rcat_ref[...], xbn, preferred_element_type=jnp.float32)  # (2*NHo, WC)
    mrow = jnp.maximum(hm[0:NHo, :], hm[NHo:2 * NHo, :])                  # (NHo, WC)
    mw = jnp.dot(mrow, swcat_ref[...], preferred_element_type=jnp.float32)  # (NHo, 2*WoC)
    p_out_ref[...] = jnp.maximum(mw, pltpu.roll(mw, WoC, axis=1))


def _band_matrices(wgt, W):
    """Fold W- and channel-taps of an HWIO conv weight into one banded matrix per conv.

    Returns M with shape (K*W*Cin, W*Cout) where
      M[dy*W*Cin + w_in*Cin + ci, w_out*Cout + co] = wgt[dy, w_in - w_out + PAD, ci, co]
    (zero where the dx tap falls outside the kernel => 'same' zero padding in W).
    """
    Kh, Kw, Cin, Cout = wgt.shape
    w_in = jnp.arange(W)[:, None]
    w_out = jnp.arange(W)[None, :]
    dx = w_in - w_out + PAD                               # (W, W)
    valid = (dx >= 0) & (dx < Kw)
    dxc = jnp.clip(dx, 0, Kw - 1)
    m = wgt[:, dxc, :, :]                                 # (Kh, W_in, W_out, Cin, Cout)
    m = jnp.where(valid[None, :, :, None, None], m, 0.0)
    m = jnp.transpose(m, (0, 1, 3, 2, 4))                 # (Kh, W_in, Cin, W_out, Cout)
    return m.reshape(Kh * W * Cin, W * Cout)


def encoder_block_forward(x_nchw, params):
    """x_nchw: (N, Cin, H, W) float32.  Returns (x, p) in NCHW like the PyTorch module."""
    w1, b1, w2, b2, gamma, beta = params
    N, Cin, H, W = x_nchw.shape
    Cout = w1.shape[-1]
    Hp = H + 2 * PAD
    Ho, Wo = H // 2, W // 2
    WC, WoC = W * Cout, Wo * Cout
    NH, NHo = N * H, N * Ho
    assert H % 2 == 0 and W % 2 == 0
    assert (W & (W - 1)) == 0, "lane-butterfly BN reduce assumes W is a power of two"

    # NHWC + H-pad (W 'same' padding lives in the band matrices), then im2col over the K
    # h-taps so conv1 is a single fused MXU matmul inside the kernel.
    # TODO(synk): accept/return NHWC directly to drop the NCHW<->NHWC transpose passes when
    #             the surrounding model allows it.
    x = jnp.transpose(x_nchw, (0, 2, 3, 1)).astype(jnp.float32)
    xh = jnp.pad(x, ((0, 0), (PAD, PAD), (0, 0), (0, 0)))                 # (N, Hp, W, Cin)
    xcat = jnp.stack([xh[:, dy:dy + H] for dy in range(K)], axis=2)       # (N, H, K, W, Cin)
    xcat = xcat.reshape(NH, K * W * Cin).astype(CONV_MXU_DTYPE)

    m1cat = _band_matrices(w1.astype(jnp.float32), W).astype(CONV_MXU_DTYPE)  # (K*W*Cin, WC)
    m2cat = _band_matrices(w2.astype(jnp.float32), W).astype(CONV_MXU_DTYPE)  # (K*W*Cout, WC)

    b1_l = jnp.tile(b1.astype(jnp.float32), W)[None, :]   # (1, WC), lane = w*Cout + c
    b2_l = jnp.tile(b2.astype(jnp.float32), W)[None, :]
    g_l = jnp.tile(gamma.astype(jnp.float32), W)[None, :]
    be_l = jnp.tile(beta.astype(jnp.float32), W)[None, :]

    # Exact 0/1 selection matrices for the 2x2 max pool (kept f32: pooling must pick the
    # exact BN values).  swcat = [even-w | odd-w] columns; rcat = [even-h ; odd-h] rows.
    eyeC = jnp.eye(Cout, dtype=jnp.float32)
    sel_we = (jnp.arange(W)[:, None] == 2 * jnp.arange(Wo)[None, :]).astype(jnp.float32)
    sel_wo = (jnp.arange(W)[:, None] == 2 * jnp.arange(Wo)[None, :] + 1).astype(jnp.float32)
    swcat = jnp.concatenate([jnp.kron(sel_we, eyeC), jnp.kron(sel_wo, eyeC)],
                            axis=1)                                        # (WC, 2*WoC)
    sel_he = (2 * jnp.arange(Ho)[:, None] == jnp.arange(H)[None, :]).astype(jnp.float32)
    sel_ho = (2 * jnp.arange(Ho)[:, None] + 1 == jnp.arange(H)[None, :]).astype(jnp.float32)
    rcat = jnp.concatenate([jnp.kron(jnp.eye(N, dtype=jnp.float32), sel_he),
                            jnp.kron(jnp.eye(N, dtype=jnp.float32), sel_ho)],
                           axis=0)                                         # (2*NHo, NH)

    def full(shape):
        return pl.BlockSpec(shape, lambda *_: (0,) * len(shape))

    kernel = functools.partial(encoder_block_kernel,
                               cout=Cout, inv_count=1.0 / float(N * H * W))

    x2d, p2d = pl.pallas_call(
        kernel,
        out_shape=(jax.ShapeDtypeStruct((NH, WC), jnp.float32),
                   jax.ShapeDtypeStruct((NHo, 2 * WoC), jnp.float32)),
        grid_spec=pltpu.PrefetchScalarGridSpec(
            num_scalar_prefetch=0,
            grid=(1,),
            in_specs=[full(xcat.shape), full(m1cat.shape), full(b1_l.shape),
                      full(m2cat.shape), full(b2_l.shape), full(g_l.shape),
                      full(be_l.shape), full(swcat.shape), full(rcat.shape)],
            out_specs=[full((NH, WC)), full((NHo, 2 * WoC))],
            scratch_shapes=[pltpu.VMEM((N, Hp, WC), jnp.float32)]),
        compiler_params=pltpu.CompilerParams(
            dimension_semantics=("arbitrary",),
            vmem_limit_bytes=32 * 1024 * 1024),
    )(xcat, m1cat, b1_l, m2cat, b2_l, g_l, be_l, swcat, rcat)

    x_out = x2d.reshape(N, H, W, Cout)                    # (N*H, W*C) is row-major NHWC
    p_out = p2d[:, :WoC].reshape(N, Ho, Wo, Cout)         # pooled max duplicated in top lanes
    return (jnp.transpose(x_out, (0, 3, 1, 2)),
            jnp.transpose(p_out, (0, 3, 1, 2)))


def reference_forward(x_nchw, params, conv_dtype=jnp.float32):
    """Plain-JAX reference (PyTorch encoder_block.forward, training mode).

    `conv_dtype` rounds the conv operands (activations + weights) before each conv with f32
    accumulation, mirroring the kernel's MXU precision policy; everything else stays f32.
    """
    w1, b1, w2, b2, gamma, beta = params
    x = jnp.transpose(x_nchw, (0, 2, 3, 1)).astype(jnp.float32)
    dn = lax.conv_dimension_numbers(x.shape, w1.shape, ('NHWC', 'HWIO', 'NHWC'))

    def conv(inp, w):
        return lax.conv_general_dilated(
            inp.astype(conv_dtype), w.astype(conv_dtype), (1, 1), [(PAD, PAD)] * 2,
            dimension_numbers=dn, preferred_element_type=jnp.float32)

    y = conv(x, w1) + b1
    y = conv(y, w2) + b2
    y = _selu(_selu(y))
    mean = jnp.mean(y, axis=(0, 1, 2), keepdims=True)
    var = jnp.mean((y - mean) ** 2, axis=(0, 1, 2), keepdims=True)
    y = (y - mean) / jnp.sqrt(var + BN_EPS) * gamma + beta
    p = lax.reduce_window(y, -jnp.inf, lax.max, (1, 2, 2, 1), (1, 2, 2, 1), 'VALID')
    return (jnp.transpose(y, (0, 3, 1, 2)), jnp.transpose(p, (0, 3, 1, 2)))


if __name__ == "__main__":
    N, Cin, Cout, H, W = 2, 4, 8, 16, 16

    key = jax.random.PRNGKey(0)
    k1, k2, k3, k4, k5 = jax.random.split(key, 5)
    w1 = 0.1 * jax.random.normal(k1, (K, K, Cin, Cout), jnp.float32)
    b1 = 0.1 * jax.random.normal(k2, (Cout,), jnp.float32)
    w2 = 0.1 * jax.random.normal(k3, (K, K, Cout, Cout), jnp.float32)
    b2 = 0.1 * jax.random.normal(k4, (Cout,), jnp.float32)
    gamma = jnp.ones((Cout,), jnp.float32)    # BatchNorm2d default weight
    beta = jnp.zeros((Cout,), jnp.float32)    # BatchNorm2d default bias
    params = (w1, b1, w2, b2, gamma, beta)

    x = jax.random.normal(k5, (N, Cin, H, W), jnp.float32)

    x_out, p_out = jax.block_until_ready(encoder_block_forward(x, params))

    assert x_out.shape == (N, Cout, H, W)
    assert p_out.shape == (N, Cout, H // 2, W // 2)

    # (1) Functional check against the module evaluated with the kernel's declared precision
    #     policy (conv operands in CONV_MXU_DTYPE, f32 accumulation, everything else f32).
    #     Typical agreement is ~1e-5; tolerance leaves headroom for bf16 tie-rounding of the
    #     conv1->conv2 intermediate.
    x_rq, p_rq = reference_forward(x, params, conv_dtype=CONV_MXU_DTYPE)
    assert jnp.allclose(x_out, x_rq, atol=1e-2, rtol=1e-2), \
        float(jnp.max(jnp.abs(x_out - x_rq)))
    assert jnp.allclose(p_out, p_rq, atol=1e-2, rtol=1e-2), \
        float(jnp.max(jnp.abs(p_out - p_rq)))

    # (2) Envelope check against the exact f32 module: the only difference is bf16 rounding
    #     of the conv operands (~1e-2 after two 5x5 convs + BatchNorm).  Setting
    #     CONV_MXU_DTYPE = jnp.float32 tightens this agreement to ~1e-3.
    x_ref, p_ref = reference_forward(x, params, conv_dtype=jnp.float32)
    assert jnp.allclose(x_out, x_ref, atol=6e-2, rtol=2e-2), \
        float(jnp.max(jnp.abs(x_out - x_ref)))
    assert jnp.allclose(p_out, p_ref, atol=6e-2, rtol=2e-2), \
        float(jnp.max(jnp.abs(p_out - p_ref)))

    print("KERNEL_OK")
</pallas_src>

<mosaic_0001>
module attributes {stable_mosaic.version = 11 : i64} {
  func.func @encoder_block_kernel(%arg0: i32, %arg1: memref<32x320xbf16, #tpu.memory_space<vmem>>, %arg2: memref<320x128xbf16, #tpu.memory_space<vmem>>, %arg3: memref<1x128xf32, #tpu.memory_space<vmem>>, %arg4: memref<640x128xbf16, #tpu.memory_space<vmem>>, %arg5: memref<1x128xf32, #tpu.memory_space<vmem>>, %arg6: memref<1x128xf32, #tpu.memory_space<vmem>>, %arg7: memref<1x128xf32, #tpu.memory_space<vmem>>, %arg8: memref<128x128xf32, #tpu.memory_space<vmem>>, %arg9: memref<32x32xf32, #tpu.memory_space<vmem>>, %arg10: memref<32x128xf32, #tpu.memory_space<vmem>>, %arg11: memref<16x128xf32, #tpu.memory_space<vmem>>, %arg12: memref<2x20x128xf32, #tpu.memory_space<vmem>>) attributes {dimension_semantics = [#tpu.dimension_semantics<arbitrary>], iteration_bounds = array<i64: 1>, scalar_prefetch = 0 : i64, scratch_operands = 1 : i64, tpu.core_type = #tpu.core_type<tc>, window_params = [{pipeline_mode = #tpu.pipeline_mode<synchronous>, transform_indices = @transform_0, window_bounds = array<i64: 32, 320>}, {pipeline_mode = #tpu.pipeline_mode<synchronous>, transform_indices = @transform_1, window_bounds = array<i64: 320, 128>}, {pipeline_mode = #tpu.pipeline_mode<synchronous>, transform_indices = @transform_2, window_bounds = array<i64: 1, 128>}, {pipeline_mode = #tpu.pipeline_mode<synchronous>, transform_indices = @transform_3, window_bounds = array<i64: 640, 128>}, {pipeline_mode = #tpu.pipeline_mode<synchronous>, transform_indices = @transform_4, window_bounds = array<i64: 1, 128>}, {pipeline_mode = #tpu.pipeline_mode<synchronous>, transform_indices = @transform_5, window_bounds = array<i64: 1, 128>}, {pipeline_mode = #tpu.pipeline_mode<synchronous>, transform_indices = @transform_6, window_bounds = array<i64: 1, 128>}, {pipeline_mode = #tpu.pipeline_mode<synchronous>, transform_indices = @transform_7, window_bounds = array<i64: 128, 128>}, {pipeline_mode = #tpu.pipeline_mode<synchronous>, transform_indices = @transform_8, window_bounds = array<i64: 32, 32>}, {pipeline_mode = #tpu.pipeline_mode<synchronous>, transform_indices = @transform_9, window_bounds = array<i64: 32, 128>}, {pipeline_mode = #tpu.pipeline_mode<synchronous>, transform_indices = @transform_10, window_bounds = array<i64: 16, 128>}]} {
    %c0 = arith.constant 0 : index
    %c0_0 = arith.constant 0 : index
    %0 = vector.load %arg1[%c0, %c0_0] : memref<32x320xbf16, #tpu.memory_space<vmem>>, vector<32x320xbf16>
    %c0_1 = arith.constant 0 : index
    %c0_2 = arith.constant 0 : index
    %1 = vector.load %arg2[%c0_1, %c0_2] : memref<320x128xbf16, #tpu.memory_space<vmem>>, vector<320x128xbf16>
    %cst = arith.constant dense<0.000000e+00> : vector<32x128xf32>
    %2 = tpu.matmul %0, %1, %cst {dimension_numbers = #tpu.dot_dimension_numbers<[1], [0], [0], [1], [0, 0, 1, 1], [], []>} : vector<32x320xbf16>, vector<320x128xbf16>, vector<32x128xf32> -> vector<32x128xf32>
    %c0_3 = arith.constant 0 : index
    %c0_4 = arith.constant 0 : index
    %3 = vector.load %arg3[%c0_3, %c0_4] : memref<1x128xf32, #tpu.memory_space<vmem>>, vector<1x128xf32>
    %4 = vector.broadcast %3 : vector<1x128xf32> to vector<32x128xf32>
    %5 = arith.addf %2, %4 : vector<32x128xf32>
    %cst_5 = arith.constant 0.000000e+00 : f32
    %6 = vector.broadcast %cst_5 : f32 to vector<2x2x128xf32>
    %c0_6 = arith.constant 0 : index
    %c0_7 = arith.constant 0 : index
    %c0_8 = arith.constant 0 : index
    %7 = vector.load %arg12[%c0_6, %c0_7, %c0_8] : memref<2x20x128xf32, #tpu.memory_space<vmem>>, vector<2x2x128xf32>
    tpu.vector_store %arg12[%c0_6, %c0_7, %c0_8], %6 {strides = array<i32>} : memref<2x20x128xf32, #tpu.memory_space<vmem>>, vector<2x2x128xf32>,
    %c0_9 = arith.constant 0 : index
    %c18 = arith.constant 18 : index
    %c0_10 = arith.constant 0 : index
    %8 = vector.load %arg12[%c0_9, %c18, %c0_10] : memref<2x20x128xf32, #tpu.memory_space<vmem>>, vector<2x2x128xf32>
    tpu.vector_store %arg12[%c0_9, %c18, %c0_10], %6 {strides = array<i32>} : memref<2x20x128xf32, #tpu.memory_space<vmem>>, vector<2x2x128xf32>,
    %9 = vector.shape_cast %5 : vector<32x128xf32> to vector<2x16x128xf32>
    %c0_11 = arith.constant 0 : index
    %c2 = arith.constant 2 : index
    %c0_12 = arith.constant 0 : index
    %10 = vector.load %arg12[%c0_11, %c2, %c0_12] : memref<2x20x128xf32, #tpu.memory_space<vmem>>, vector<2x16x128xf32>
    tpu.vector_store %arg12[%c0_11, %c2, %c0_12], %9 {strides = array<i32>} : memref<2x20x128xf32, #tpu.memory_space<vmem>>, vector<2x16x128xf32>,
    %c0_13 = arith.constant 0 : index
    %c0_14 = arith.constant 0 : index
    %c0_15 = arith.constant 0 : index
    %11 = vector.load %arg12[%c0_13, %c0_14, %c0_15] : memref<2x20x128xf32, #tpu.memory_space<vmem>>, vector<2x16x128xf32>
    %12 = vector.shape_cast %11 : vector<2x16x128xf32> to vector<32x128xf32>
    %c0_16 = arith.constant 0 : index
    %c1 = arith.constant 1 : index
    %c0_17 = arith.constant 0 : index
    %13 = vector.load %arg12[%c0_16, %c1, %c0_17] : memref<2x20x128xf32, #tpu.memory_space<vmem>>, vector<2x16x128xf32>
    %14 = vector.shape_cast %13 : vector<2x16x128xf32> to vector<32x128xf32>
    %c0_18 = arith.constant 0 : index
    %c2_19 = arith.constant 2 : index
    %c0_20 = arith.constant 0 : index
    %15 = vector.load %arg12[%c0_18, %c2_19, %c0_20] : memref<2x20x128xf32, #tpu.memory_space<vmem>>, vector<2x16x128xf32>
    %16 = vector.shape_cast %15 : vector<2x16x128xf32> to vector<32x128xf32>
    %c0_21 = arith.constant 0 : index
    %c3 = arith.constant 3 : index
    %c0_22 = arith.constant 0 : index
    %17 = vector.load %arg12[%c0_21, %c3, %c0_22] : memref<2x20x128xf32, #tpu.memory_space<vmem>>, vector<2x16x128xf32>
    %18 = vector.shape_cast %17 : vector<2x16x128xf32> to vector<32x128xf32>
    %c0_23 = arith.constant 0 : index
    %c4 = arith.constant 4 : index
    %c0_24 = arith.constant 0 : index
    %19 = vector.load %arg12[%c0_23, %c4, %c0_24] : memref<2x20x128xf32, #tpu.memory_space<vmem>>, vector<2x16x128xf32>
    %20 = vector.shape_cast %19 : vector<2x16x128xf32> to vector<32x128xf32>
    %21 = tpu.concatenate %12, %14, %16, %18, %20 in 1 : vector<32x128xf32>, vector<32x128xf32>, vector<32x128xf32>, vector<32x128xf32>, vector<32x128xf32> -> vector<32x640xf32>
    %22 = arith.truncf %21 : vector<32x640xf32> to vector<32x640xbf16>
    %c0_25 = arith.constant 0 : index
    %c0_26 = arith.constant 0 : index
    %23 = vector.load %arg4[%c0_25, %c0_26] : memref<640x128xbf16, #tpu.memory_space<vmem>>, vector<640x128xbf16>
    %cst_27 = arith.constant dense<0.000000e+00> : vector<32x128xf32>
    %24 = tpu.matmul %22, %23, %cst_27 {dimension_numbers = #tpu.dot_dimension_numbers<[1], [0], [0], [1], [0, 0, 1, 1], [], []>} : vector<32x640xbf16>, vector<640x128xbf16>, vector<32x128xf32> -> vector<32x128xf32>
    %c0_28 = arith.constant 0 : index
    %c0_29 = arith.constant 0 : index
    %25 = vector.load %arg5[%c0_28, %c0_29] : memref<1x128xf32, #tpu.memory_space<vmem>>, vector<1x128xf32>
    %26 = vector.broadcast %25 : vector<1x128xf32> to vector<32x128xf32>
    %27 = arith.addf %24, %26 : vector<32x128xf32>
    %cst_30 = arith.constant 0.000000e+00 : f32
    %28 = vector.broadcast %cst_30 : f32 to vector<32x128xf32>
    %29 = arith.cmpf ogt, %27, %28 : vector<32x128xf32>
    %30 = math.exp %27 : vector<32x128xf32>
    %cst_31 = arith.constant 1.000000e+00 : f32
    %31 = vector.broadcast %cst_31 : f32 to vector<32x128xf32>
    %32 = arith.subf %30, %31 : vector<32x128xf32>
    %cst_32 = arith.constant 1.67326319 : f32
    %33 = vector.broadcast %cst_32 : f32 to vector<32x128xf32>
    %34 = arith.mulf %33, %32 : vector<32x128xf32>
    %35 = arith.select %29, %27, %34 : vector<32x128xi1>, vector<32x128xf32>
    %cst_33 = arith.constant 1.05070102 : f32
    %36 = vector.broadcast %cst_33 : f32 to vector<32x128xf32>
    %37 = arith.mulf %36, %35 : vector<32x128xf32>
    %cst_34 = arith.constant 0.000000e+00 : f32
    %38 = vector.broadcast %cst_34 : f32 to vector<32x128xf32>
    %39 = arith.cmpf ogt, %37, %38 : vector<32x128xf32>
    %40 = math.exp %37 : vector<32x128xf32>
    %cst_35 = arith.constant 1.000000e+00 : f32
    %41 = vector.broadcast %cst_35 : f32 to vector<32x128xf32>
    %42 = arith.subf %40, %41 : vector<32x128xf32>
    %cst_36 = arith.constant 1.67326319 : f32
    %43 = vector.broadcast %cst_36 : f32 to vector<32x128xf32>
    %44 = arith.mulf %43, %42 : vector<32x128xf32>
    %45 = arith.select %39, %37, %44 : vector<32x128xi1>, vector<32x128xf32>
    %cst_37 = arith.constant 1.05070102 : f32
    %46 = vector.broadcast %cst_37 : f32 to vector<32x128xf32>
    %47 = arith.mulf %46, %45 : vector<32x128xf32>
    %cst_38 = arith.constant dense<0.000000e+00> : vector<128xf32>
    %48 = vector.multi_reduction <add>, %47, %cst_38 [0] : vector<32x128xf32> to vector<128xf32>
    %49 = vector.shape_cast %48 : vector<128xf32> to vector<1x128xf32>
    %50 = arith.mulf %47, %47 : vector<32x128xf32>
    %cst_39 = arith.constant dense<0.000000e+00> : vector<128xf32>
    %51 = vector.multi_reduction <add>, %50, %cst_39 [0] : vector<32x128xf32> to vector<128xf32>
    %52 = vector.shape_cast %51 : vector<128xf32> to vector<1x128xf32>
    %c64_i32 = arith.constant 64 : i32
    %53 = tpu.dynamic_rotate %49 by %c64_i32 dim 1 : vector<1x128xf32>, i32 -> vector<1x128xf32>
    %54 = arith.addf %49, %53 : vector<1x128xf32>
    %c64_i32_40 = arith.constant 64 : i32
    %55 = tpu.dynamic_rotate %52 by %c64_i32_40 dim 1 : vector<1x128xf32>, i32 -> vector<1x128xf32>
    %56 = arith.addf %52, %55 : vector<1x128xf32>
    %c32_i32 = arith.constant 32 : i32
    %57 = tpu.dynamic_rotate %54 by %c32_i32 dim 1 : vector<1x128xf32>, i32 -> vector<1x128xf32>
    %58 = arith.addf %54, %57 : vector<1x128xf32>
    %c32_i32_41 = arith.constant 32 : i32
    %59 = tpu.dynamic_rotate %56 by %c32_i32_41 dim 1 : vector<1x128xf32>, i32 -> vector<1x128xf32>
    %60 = arith.addf %56, %59 : vector<1x128xf32>
    %c16_i32 = arith.constant 16 : i32
    %61 = tpu.dynamic_rotate %58 by %c16_i32 dim 1 : vector<1x128xf32>, i32 -> vector<1x128xf32>
    %62 = arith.addf %58, %61 : vector<1x128xf32>
    %c16_i32_42 = arith.constant 16 : i32
    %63 = tpu.dynamic_rotate %60 by %c16_i32_42 dim 1 : vector<1x128xf32>, i32 -> vector<1x128xf32>
    %64 = arith.addf %60, %63 : vector<1x128xf32>
    %c8_i32 = arith.constant 8 : i32
    %65 = tpu.dynamic_rotate %62 by %c8_i32 dim 1 : vector<1x128xf32>, i32 -> vector<1x128xf32>
    %66 = arith.addf %62, %65 : vector<1x128xf32>
    %c8_i32_43 = arith.constant 8 : i32
    %67 = tpu.dynamic_rotate %64 by %c8_i32_43 dim 1 : vector<1x128xf32>, i32 -> vector<1x128xf32>
    %68 = arith.addf %64, %67 : vector<1x128xf32>
    %cst_44 = arith.constant 0.001953125 : f32
    %69 = vector.broadcast %cst_44 : f32 to vector<1x128xf32>
    %70 = arith.mulf %66, %69 : vector<1x128xf32>
    %cst_45 = arith.constant 0.001953125 : f32
    %71 = vector.broadcast %cst_45 : f32 to vector<1x128xf32>
    %72 = arith.mulf %68, %71 : vector<1x128xf32>
    %73 = arith.mulf %70, %70 : vector<1x128xf32>
    %74 = arith.subf %72, %73 : vector<1x128xf32>
    %cst_46 = arith.constant 9.99999974E-6 : f32
    %75 = vector.broadcast %cst_46 : f32 to vector<1x128xf32>
    %76 = arith.addf %74, %75 : vector<1x128xf32>
    %77 = math.rsqrt %76 : vector<1x128xf32>
    %78 = vector.broadcast %70 : vector<1x128xf32> to vector<32x128xf32>
    %79 = arith.subf %47, %78 : vector<32x128xf32>
    %c0_47 = arith.constant 0 : index
    %c0_48 = arith.constant 0 : index
    %80 = vector.load %arg6[%c0_47, %c0_48] : memref<1x128xf32, #tpu.memory_space<vmem>>, vector<1x128xf32>
    %81 = arith.mulf %77, %80 : vector<1x128xf32>
    %82 = vector.broadcast %81 : vector<1x128xf32> to vector<32x128xf32>
    %83 = arith.mulf %79, %82 : vector<32x128xf32>
    %c0_49 = arith.constant 0 : index
    %c0_50 = arith.constant 0 : index
    %84 = vector.load %arg7[%c0_49, %c0_50] : memref<1x128xf32, #tpu.memory_space<vmem>>, vector<1x128xf32>
    %85 = vector.broadcast %84 : vector<1x128xf32> to vector<32x128xf32>
    %86 = arith.addf %83, %85 : vector<32x128xf32>
    %c0_51 = arith.constant 0 : index
    %c0_52 = arith.constant 0 : index
    %87 = vector.load %arg10[%c0_51, %c0_52] : memref<32x128xf32, #tpu.memory_space<vmem>>, vector<32x128xf32>
    tpu.vector_store %arg10[%c0_51, %c0_52], %86 {strides = array<i32>} : memref<32x128xf32, #tpu.memory_space<vmem>>, vector<32x128xf32>,
    %c0_53 = arith.constant 0 : index
    %c0_54 = arith.constant 0 : index
    %88 = vector.load %arg9[%c0_53, %c0_54] : memref<32x32xf32, #tpu.memory_space<vmem>>, vector<32x32xf32>
    %cst_55 = arith.constant dense<0.000000e+00> : vector<32x128xf32>
    %89 = tpu.matmul %88, %86, %cst_55 {dimension_numbers = #tpu.dot_dimension_numbers<[1], [0], [0], [1], [0, 0, 1, 1], [], []>} : vector<32x32xf32>, vector<32x128xf32>, vector<32x128xf32> -> vector<32x128xf32>
    %90 = vector.extract_strided_slice %89 {offsets = [0, 0], sizes = [16, 128], strides = [1, 1]} : vector<32x128xf32> to vector<16x128xf32>
    %91 = vector.extract_strided_slice %89 {offsets = [16, 0], sizes = [16, 128], strides = [1, 1]} : vector<32x128xf32> to vector<16x128xf32>
    %92 = arith.maximumf %90, %91 : vector<16x128xf32>
    %c0_56 = arith.constant 0 : index
    %c0_57 = arith.constant 0 : index
    %93 = vector.load %arg8[%c0_56, %c0_57] : memref<128x128xf32, #tpu.memory_space<vmem>>, vector<128x128xf32>
    %cst_58 = arith.constant dense<0.000000e+00> : vector<16x128xf32>
    %94 = tpu.matmul %92, %93, %cst_58 {dimension_numbers = #tpu.dot_dimension_numbers<[1], [0], [0], [1], [0, 0, 1, 1], [], []>} : vector<16x128xf32>, vector<128x128xf32>, vector<16x128xf32> -> vector<16x128xf32>
    %c64_i32_59 = arith.constant 64 : i32
    %95 = tpu.dynamic_rotate %94 by %c64_i32_59 dim 1 : vector<16x128xf32>, i32 -> vector<16x128xf32>
    %96 = arith.maximumf %94, %95 : vector<16x128xf32>
    %c0_60 = arith.constant 0 : index
    %c0_61 = arith.constant 0 : index
    %97 = vector.load %arg11[%c0_60, %c0_61] : memref<16x128xf32, #tpu.memory_space<vmem>>, vector<16x128xf32>
    tpu.vector_store %arg11[%c0_60, %c0_61], %96 {strides = array<i32>} : memref<16x128xf32, #tpu.memory_space<vmem>>, vector<16x128xf32>,
    return
  }
  func.func @transform_0(%arg0: i32) -> (i32, i32) {
    %c0_i32 = arith.constant 0 : i32
    %c0_i32_0 = arith.constant 0 : i32
    %c0_i32_1 = arith.constant 0 : i32
    return %c0_i32, %c0_i32_0 : i32, i32
  }
  func.func @transform_1(%arg0: i32) -> (i32, i32) {
    %c0_i32 = arith.constant 0 : i32
    %c0_i32_0 = arith.constant 0 : i32
    %c0_i32_1 = arith.constant 0 : i32
    return %c0_i32, %c0_i32_0 : i32, i32
  }
  func.func @transform_2(%arg0: i32) -> (i32, i32) {
    %c0_i32 = arith.constant 0 : i32
    %c0_i32_0 = arith.constant 0 : i32
    %c0_i32_1 = arith.constant 0 : i32
    return %c0_i32, %c0_i32_0 : i32, i32
  }
  func.func @transform_3(%arg0: i32) -> (i32, i32) {
    %c0_i32 = arith.constant 0 : i32
    %c0_i32_0 = arith.constant 0 : i32
    %c0_i32_1 = arith.constant 0 : i32
    return %c0_i32, %c0_i32_0 : i32, i32
  }
  func.func @transform_4(%arg0: i32) -> (i32, i32) {
    %c0_i32 = arith.constant 0 : i32
    %c0_i32_0 = arith.constant 0 : i32
    %c0_i32_1 = arith.constant 0 : i32
    return %c0_i32, %c0_i32_0 : i32, i32
  }
  func.func @transform_5(%arg0: i32) -> (i32, i32) {
    %c0_i32 = arith.constant 0 : i32
    %c0_i32_0 = arith.constant 0 : i32
    %c0_i32_1 = arith.constant 0 : i32
    return %c0_i32, %c0_i32_0 : i32, i32
  }
  func.func @transform_6(%arg0: i32) -> (i32, i32) {
    %c0_i32 = arith.constant 0 : i32
    %c0_i32_0 = arith.constant 0 : i32
    %c0_i32_1 = arith.constant 0 : i32
    return %c0_i32, %c0_i32_0 : i32, i32
  }
  func.func @transform_7(%arg0: i32) -> (i32, i32) {
    %c0_i32 = arith.constant 0 : i32
    %c0_i32_0 = arith.constant 0 : i32
    %c0_i32_1 = arith.constant 0 : i32
    return %c0_i32, %c0_i32_0 : i32, i32
  }
  func.func @transform_8(%arg0: i32) -> (i32, i32) {
    %c0_i32 = arith.constant 0 : i32
    %c0_i32_0 = arith.constant 0 : i32
    %c0_i32_1 = arith.constant 0 : i32
    return %c0_i32, %c0_i32_0 : i32, i32
  }
  func.func @transform_9(%arg0: i32) -> (i32, i32) {
    %c0_i32 = arith.constant 0 : i32
    %c0_i32_0 = arith.constant 0 : i32
    %c0_i32_1 = arith.constant 0 : i32
    return %c0_i32, %c0_i32_0 : i32, i32
  }
  func.func @transform_10(%arg0: i32) -> (i32, i32) {
    %c0_i32 = arith.constant 0 : i32
    %c0_i32_0 = arith.constant 0 : i32
    %c0_i32_1 = arith.constant 0 : i32
    return %c0_i32, %c0_i32_0 : i32, i32
  }
}

</mosaic_0001>

<llo_original>
// kernel: tpu_custom_call.1
$region0: #{tpu_custom_call.1}
  #allocation0 [shape = 'u32[]', space=smem, size = 0x4, offset = 0x4, fixed_abs, tag = 'smem constant byte address 0x4 - core index']
  #allocation1 [shape = 'u32[72,128]{1,0:T(1,128)}', space=vmem, size = 0x9000, scoped, tag = 'internal scratch']
  #allocation2 [shape = 'f32[2,20,128]{2,1,0:T(8,128)}', space=vmem, size = 0x6000, scoped, tag = 'scratch operand']
  %s0 = inlined_call_operand.hbm [shape: bf16[32,320], index: 0, kind: input, shape index: {}]
  %s1 = inlined_call_operand.hbm [shape: bf16[320,128], index: 1, kind: input, shape index: {}]
  %s2 = inlined_call_operand.vmem [shape: f32[1,128], index: 2, kind: input, shape index: {}]
  %s3 = inlined_call_operand.hbm [shape: bf16[640,128], index: 3, kind: input, shape index: {}]
  %s4 = inlined_call_operand.vmem [shape: f32[1,128], index: 4, kind: input, shape index: {}]
  %s5 = inlined_call_operand.vmem [shape: f32[1,128], index: 5, kind: input, shape index: {}]
  %s6 = inlined_call_operand.vmem [shape: f32[1,128], index: 6, kind: input, shape index: {}]
  %s7 = inlined_call_operand.hbm [shape: f32[128,128], index: 7, kind: input, shape index: {}]
  %s8 = inlined_call_operand.hbm [shape: f32[32,32], index: 8, kind: input, shape index: {}]
  %s9 = inlined_call_operand.hbm [shape: f32[32,128], index: 9, kind: output, shape index: {0}]
  %s10 = inlined_call_operand.hbm [shape: f32[16,128], index: 10, kind: output, shape index: {1}]
  %11 = xla_tuple %s9, %s10
  %s12 = sld [smem:[#allocation0]]
  $region74: #{tpu_custom_call.1} parent=0
    _
  %s14 = ssub.s32 1, %s12
  %s15 = scalar_select 0, %s14, %s12
  $region1: #{tpu_custom_call.1} parent=0
    #allocation3 [shape = 'u8[24576]{0}', space=vmem, size = 0x6000, scoped, tag = 'input window, operand 0, single buffered']
    #allocation4 [shape = 's32[1]{0}', space=sflag, size = 0x4, scoped, tag = 'scoped memory for tpu_custom_call.1']
    #allocation5 [shape = 's32[1]{0}', space=sflag, size = 0x4, scoped, tag = 'scoped memory for tpu_custom_call.1']
    #allocation6 [shape = 'u8[81920]{0}', space=vmem, size = 0x14000, scoped, tag = 'input window, operand 1, single buffered']
    #allocation7 [shape = 's32[1]{0}', space=sflag, size = 0x4, scoped, tag = 'scoped memory for tpu_custom_call.1']
    #allocation8 [shape = 'u8[163840]{0}', space=vmem, size = 0x28000, scoped, tag = 'input window, operand 3, single buffered']
    #allocation9 [shape = 'u8[65536]{0}', space=vmem, size = 0x10000, scoped, tag = 'input window, operand 7, single buffered']
    #allocation10 [shape = 's32[1]{0}', space=sflag, size = 0x4, scoped, tag = 'scoped memory for tpu_custom_call.1']
    #allocation11 [shape = 'u8[16384]{0}', space=vmem, size = 0x4000, scoped, tag = 'input window, operand 8, single buffered']
    #allocation12 [shape = 'u8[16384]{0}', space=vmem, size = 0x4000, scoped, tag = 'output window, operand 0, single buffered']
    #allocation13 [shape = 'u8[8192]{0}', space=vmem, size = 0x2000, scoped, tag = 'output window, operand 1, single buffered']
    #allocation14 [shape = 's32[1]{0}', space=sflag, size = 0x4, scoped, tag = 'scoped memory for tpu_custom_call.1']
    %16 = vsyncpa [#allocation4], 0
    %17 = vsyncpa [#allocation7], 0
    %18 = vsyncpa [#allocation10], 0
    %19 = vsyncpa [#allocation5], 0
    %20 = vsyncpa [#allocation14], 0
    // Predicated region
    $region2: #{tpu_custom_call.1} parent=1 // pred_check
      _
    $region3: #{tpu_custom_call.1} parent=1 // pred_check_branch
      %22 = sbr.rel (0) target = $region5
    $region4: #{tpu_custom_call.1} parent=1 // pred_region
      %24 = vsyncadd [#allocation4], 0
      %s25 = sshll.u32 %s0, 4
      %s26 = int_to_ptr.hbm [resolvable:$true] %s25
      %s27 = sshll.u32 [#allocation3], 4
      %s28 = int_to_ptr.vmem [resolvable:$true] %s27
      %33 = dma.hbm_to_vmem [thread:$0]  %s26, 768, %s28, [#allocation4], 192, 192, 12
    $region5: #{tpu_custom_call.1} parent=1 // pred_fallthru
      _
    // Predicated region
    $region6: #{tpu_custom_call.1} parent=1 // pred_check
      _
    $region7: #{tpu_custom_call.1} parent=1 // pred_check_branch
      %35 = sbr.rel (0) target = $region9
    $region8: #{tpu_custom_call.1} parent=1 // pred_region
      %37 = vsyncadd [#allocation7], 0
      %s38 = sshll.u32 %s1, 4
      %s39 = int_to_ptr.hbm [resolvable:$true] %s38
      %s40 = sshll.u32 [#allocation6], 4
      %s41 = int_to_ptr.vmem [resolvable:$true] %s40
      %46 = dma.hbm_to_vmem [thread:$0]  %s39, 2560, %s41, [#allocation7], 64, 64, 4
    $region9: #{tpu_custom_call.1} parent=1 // pred_fallthru
      _
    // Predicated region
    $region10: #{tpu_custom_call.1} parent=1 // pred_check
      _
    $region11: #{tpu_custom_call.1} parent=1 // pred_check_branch
      %48 = sbr.rel (0) target = $region13
    $region12: #{tpu_custom_call.1} parent=1 // pred_region
      _
    $region13: #{tpu_custom_call.1} parent=1 // pred_fallthru
      _
    // Predicated region
    $region14: #{tpu_custom_call.1} parent=1 // pred_check
      _
    $region15: #{tpu_custom_call.1} parent=1 // pred_check_branch
      %50 = sbr.rel (0) target = $region17
    $region16: #{tpu_custom_call.1} parent=1 // pred_region
      %52 = vsyncadd [#allocation7], 0
      %s53 = sshll.u32 %s3, 4
      %s54 = int_to_ptr.hbm [resolvable:$true] %s53
      %s55 = sshll.u32 [#allocation8], 4
      %s56 = int_to_ptr.vmem [resolvable:$true] %s55
      %61 = dma.hbm_to_vmem [thread:$0]  %s54, 5120, %s56, [#allocation7], 64, 64, 4
    $region17: #{tpu_custom_call.1} parent=1 // pred_fallthru
      _
    // Predicated region
    $region18: #{tpu_custom_call.1} parent=1 // pred_check
      _
    $region19: #{tpu_custom_call.1} parent=1 // pred_check_branch
      %63 = sbr.rel (0) target = $region21
    $region20: #{tpu_custom_call.1} parent=1 // pred_region
      _
    $region21: #{tpu_custom_call.1} parent=1 // pred_fallthru
      _
    // Predicated region
    $region22: #{tpu_custom_call.1} parent=1 // pred_check
      _
    $region23: #{tpu_custom_call.1} parent=1 // pred_check_branch
      %65 = sbr.rel (0) target = $region25
    $region24: #{tpu_custom_call.1} parent=1 // pred_region
      _
    $region25: #{tpu_custom_call.1} parent=1 // pred_fallthru
      _
    // Predicated region
    $region26: #{tpu_custom_call.1} parent=1 // pred_check
      _
    $region27: #{tpu_custom_call.1} parent=1 // pred_check_branch
      %67 = sbr.rel (0) target = $region29
    $region28: #{tpu_custom_call.1} parent=1 // pred_region
      _
    $region29: #{tpu_custom_call.1} parent=1 // pred_fallthru
      _
    // Predicated region
    $region30: #{tpu_custom_call.1} parent=1 // pred_check
      _
    $region31: #{tpu_custom_call.1} parent=1 // pred_check_branch
      %69 = sbr.rel (0) target = $region33
    $region32: #{tpu_custom_call.1} parent=1 // pred_region
      %71 = vsyncadd [#allocation10], 0
      %s72 = sshll.u32 %s7, 4
      %s73 = int_to_ptr.hbm [resolvable:$true] %s72
      %s74 = sshll.u32 [#allocation9], 4
      %s75 = int_to_ptr.vmem [resolvable:$true] %s74
      %80 = dma.hbm_to_vmem [thread:$0]  %s73, 2048, %s75, [#allocation10], 128, 128, 8
    $region33: #{tpu_custom_call.1} parent=1 // pred_fallthru
      _
    // Predicated region
    $region34: #{tpu_custom_call.1} parent=1 // pred_check
      _
    $region35: #{tpu_custom_call.1} parent=1 // pred_check_branch
      %82 = sbr.rel (0) target = $region37
    $region36: #{tpu_custom_call.1} parent=1 // pred_region
      %84 = vsyncadd [#allocation10], 0
      %s85 = sshll.u32 %s8, 4
      %s86 = int_to_ptr.hbm [resolvable:$true] %s85
      %s87 = sshll.u32 [#allocation11], 4
      %s88 = int_to_ptr.vmem [resolvable:$true] %s87
      %93 = dma.hbm_to_vmem [thread:$0]  %s86, 512, %s88, [#allocation10], 128, 128, 8
    $region37: #{tpu_custom_call.1} parent=1 // pred_fallthru
      _
    // Predicated region
    $region38: #{tpu_custom_call.1} parent=1 // pred_check
      _
    $region39: #{tpu_custom_call.1} parent=1 // pred_check_branch
      %95 = sbr.rel (0) target = $region41
    $region40: #{tpu_custom_call.1} parent=1 // pred_region
      %97 = dma.done [#allocation4], 768
    $region41: #{tpu_custom_call.1} parent=1 // pred_fallthru
      _
    // Predicated region
    $region42: #{tpu_custom_call.1} parent=1 // pred_check
      _
    $region43: #{tpu_custom_call.1} parent=1 // pred_check_branch
      %99 = sbr.rel (0) target = $region45
    $region44: #{tpu_custom_call.1} parent=1 // pred_region
      %101 = dma.done [#allocation7], 2560
    $region45: #{tpu_custom_call.1} parent=1 // pred_fallthru
      _
    // Predicated region
    $region46: #{tpu_custom_call.1} parent=1 // pred_check
      _
    $region47: #{tpu_custom_call.1} parent=1 // pred_check_branch
      %103 = sbr.rel (0) target = $region49
    $region48: #{tpu_custom_call.1} parent=1 // pred_region
      %105 = dma.done [#allocation7], 5120
    $region49: #{tpu_custom_call.1} parent=1 // pred_fallthru
      _
    // Predicated region
    $region50: #{tpu_custom_call.1} parent=1 // pred_check
      _
    $region51: #{tpu_custom_call.1} parent=1 // pred_check_branch
      %107 = sbr.rel (0) target = $region53
    $region52: #{tpu_custom_call.1} parent=1 // pred_region
      %109 = dma.done [#allocation10], 2048
    $region53: #{tpu_custom_call.1} parent=1 // pred_fallthru
      _
    // Predicated region
    $region54: #{tpu_custom_call.1} parent=1 // pred_check
      _
    $region55: #{tpu_custom_call.1} parent=1 // pred_check_branch
      %111 = sbr.rel (0) target = $region57
    $region56: #{tpu_custom_call.1} parent=1 // pred_region
      %113 = dma.done [#allocation10], 512
    $region57: #{tpu_custom_call.1} parent=1 // pred_fallthru
      _
    %v115 = vld [vmem:[#allocation3] sm:$0xff]
    %v116 = vld [vmem:[#allocation3 + $0x8] sm:$0xf]
    %v117 = vld [vmem:[#allocation3 + $0xc] sm:$0xff]
    %v118 = vld [vmem:[#allocation3 + $0x14] sm:$0xf]
    %v119 = vld [vmem:[#allocation3 + $0x18] sm:$0xff]
    %v120 = vld [vmem:[#allocation3 + $0x20] sm:$0xf]
    %v121 = vld [vmem:[#allocation3 + $0x24] sm:$0xff]
    %v122 = vld [vmem:[#allocation3 + $0x2c] sm:$0xf]
    %v123 = vld [vmem:[#allocation6] sm:$0xf]
    %v124 = vld [vmem:[#allocation6 + $0x4] sm:$0xf]
    %v125 = vld [vmem:[#allocation6 + $0x8] sm:$0xf]
    %v126 = vld [vmem:[#allocation6 + $0xc] sm:$0xf]
    %v127 = vld [vmem:[#allocation6 + $0x10] sm:$0xf]
    %v128 = vld [vmem:[#allocation6 + $0x14] sm:$0xf]
    %v129 = vld [vmem:[#allocation6 + $0x18] sm:$0xf]
    %v130 = vld [vmem:[#allocation6 + $0x1c] sm:$0xf]
    %v131 = vld [vmem:[#allocation6 + $0x20] sm:$0xf]
    %v132 = vld [vmem:[#allocation6 + $0x24] sm:$0xf]
    %v133 = vld [vmem:[#allocation6 + $0x28] sm:$0xf]
    %v134 = vld [vmem:[#allocation6 + $0x2c] sm:$0xf]
    %v135 = vld [vmem:[#allocation6 + $0x30] sm:$0xf]
    %v136 = vld [vmem:[#allocation6 + $0x34] sm:$0xf]
    %v137 = vld [vmem:[#allocation6 + $0x38] sm:$0xf]
    %v138 = vld [vmem:[#allocation6 + $0x3c] sm:$0xf]
    %v139 = vld [vmem:[#allocation6 + $0x40] sm:$0xf]
    %v140 = vld [vmem:[#allocation6 + $0x44] sm:$0xf]
    %v141 = vld [vmem:[#allocation6 + $0x48] sm:$0xf]
    %v142 = vld [vmem:[#allocation6 + $0x4c] sm:$0xf]
    %v143 = vld [vmem:[#allocation6 + $0x50] sm:$0xf]
    %v144 = vld [vmem:[#allocation6 + $0x54] sm:$0xf]
    %v145 = vld [vmem:[#allocation6 + $0x58] sm:$0xf]
    %v146 = vld [vmem:[#allocation6 + $0x5c] sm:$0xf]
    %v147 = vld [vmem:[#allocation6 + $0x60] sm:$0xf]
    %v148 = vld [vmem:[#allocation6 + $0x64] sm:$0xf]
    %v149 = vld [vmem:[#allocation6 + $0x68] sm:$0xf]
    %v150 = vld [vmem:[#allocation6 + $0x6c] sm:$0xf]
    %v151 = vld [vmem:[#allocation6 + $0x70] sm:$0xf]
    %v152 = vld [vmem:[#allocation6 + $0x74] sm:$0xf]
    %v153 = vld [vmem:[#allocation6 + $0x78] sm:$0xf]
    %v154 = vld [vmem:[#allocation6 + $0x7c] sm:$0xf]
    %v155 = vld [vmem:[#allocation6 + $0x80] sm:$0xf]
    %v156 = vld [vmem:[#allocation6 + $0x84] sm:$0xf]
    %v157 = vld [vmem:[#allocation6 + $0x88] sm:$0xf]
    %v158 = vld [vmem:[#allocation6 + $0x8c] sm:$0xf]
    %v159 = vld [vmem:[#allocation6 + $0x90] sm:$0xf]
    %v160 = vld [vmem:[#allocation6 + $0x94] sm:$0xf]
    %v161 = vld [vmem:[#allocation6 + $0x98] sm:$0xf]
    %v162 = vld [vmem:[#allocation6 + $0x9c] sm:$0xf]
    %v163 = vld [vmem:[%s2] sm:$0x1]
    %v165 = vperm.slane %v163, 0
    %v175 = vunpack.c.l.b16 %v115
    %v176 = vunpack.c.h.b16 %v115
    %v177 = vunpack.c.l.b16 %v116
    %v178 = vunpack.c.l.b16 %v117
    %v179 = vunpack.c.h.b16 %v117
    %v180 = vunpack.c.l.b16 %v118
    %v181 = vunpack.c.l.b16 %v119
    %v182 = vunpack.c.h.b16 %v119
    %v183 = vunpack.c.l.b16 %v120
    %v184 = vunpack.c.l.b16 %v121
    %v185 = vunpack.c.h.b16 %v121
    %v186 = vunpack.c.l.b16 %v122
    %v187 = vpack.c.b16 %v178, %v175
    %v188 = vpack.c.b16 %v179, %v176
    %v189 = vpack.c.b16 %v180, %v177
    %v190 = vpack.c.b16 %v184, %v181
    %v191 = vpack.c.b16 %v185, %v182
    %v192 = vpack.c.b16 %v186, %v183
    %v237 = vunpack.c.l.b16 %v123
    %v238 = vunpack.c.l.b16 %v124
    %v239 = vunpack.c.l.b16 %v125
    %v240 = vunpack.c.l.b16 %v126
    %v241 = vunpack.c.l.b16 %v127
    %v242 = vunpack.c.l.b16 %v128
    %v243 = vunpack.c.l.b16 %v129
    %v244 = vunpack.c.l.b16 %v130
    %v245 = vunpack.c.l.b16 %v131
    %v246 = vunpack.c.l.b16 %v132
    %v247 = vunpack.c.l.b16 %v133
    %v248 = vunpack.c.l.b16 %v134
    %v249 = vunpack.c.l.b16 %v135
    %v250 = vunpack.c.l.b16 %v136
    %v251 = vunpack.c.l.b16 %v137
    %v252 = vunpack.c.l.b16 %v138
    %v253 = vunpack.c.l.b16 %v139
    %v254 = vunpack.c.l.b16 %v140
    %v255 = vunpack.c.l.b16 %v141
    %v256 = vunpack.c.l.b16 %v142
    %v257 = vunpack.c.l.b16 %v143
    %v258 = vunpack.c.l.b16 %v144
    %v259 = vunpack.c.l.b16 %v145
    %v260 = vunpack.c.l.b16 %v146
    %v261 = vunpack.c.l.b16 %v147
    %v262 = vunpack.c.l.b16 %v148
    %v263 = vunpack.c.l.b16 %v149
    %v264 = vunpack.c.l.b16 %v150
    %v265 = vunpack.c.l.b16 %v151
    %v266 = vunpack.c.l.b16 %v152
    %v267 = vunpack.c.l.b16 %v153
    %v268 = vunpack.c.l.b16 %v154
    %v269 = vunpack.c.l.b16 %v155
    %v270 = vunpack.c.l.b16 %v156
    %v271 = vunpack.c.l.b16 %v157
    %v272 = vunpack.c.l.b16 %v158
    %v273 = vunpack.c.l.b16 %v159
    %v274 = vunpack.c.l.b16 %v160
    %v275 = vunpack.c.l.b16 %v161
    %v276 = vunpack.c.l.b16 %v162
    %v277 = vpack.c.b16 %v238, %v237
    %v278 = vpack.c.b16 %v240, %v239
    %v279 = vpack.c.b16 %v242, %v241
    %v280 = vpack.c.b16 %v244, %v243
    %v281 = vpack.c.b16 %v246, %v245
    %v282 = vpack.c.b16 %v248, %v247
    %v283 = vpack.c.b16 %v250, %v249
    %v284 = vpack.c.b16 %v252, %v251
    %v285 = vpack.c.b16 %v254, %v253
    %v286 = vpack.c.b16 %v256, %v255
    %v287 = vpack.c.b16 %v258, %v257
    %v288 = vpack.c.b16 %v260, %v259
    %v289 = vpack.c.b16 %v262, %v261
    %v290 = vpack.c.b16 %v264, %v263
    %v291 = vpack.c.b16 %v266, %v265
    %v292 = vpack.c.b16 %v268, %v267
    %v293 = vpack.c.b16 %v270, %v269
    %v294 = vpack.c.b16 %v272, %v271
    %v295 = vpack.c.b16 %v274, %v273
    %v296 = vpack.c.b16 %v276, %v275
    %vm317 = vcmask 523264
    %v319 = vsel %vm317, %v189, 0
    %v322 = vsel %vm317, %v192, 0
    %324 = vmatpush.bf16.msra.mxu0 %v284
    %325 = vmatpush.bf16.msra.mxu0 %v283
    %326 = vmatpush.bf16.msra.mxu0 %v282
    %327 = vmatpush.bf16.msra.mxu0 %v281
    %328 = vmatpush.bf16.msra.mxu0 %v280
    %329 = vmatpush.bf16.msra.mxu0 %v279
    %330 = vmatpush.bf16.msra.mxu0 %v278
    %331 = vmatpush.bf16.msra.mxu0 %v277
    %332 = vmatmul.bf16.gmra.mxu0 %v187
    %v333 = vpop.f32.mrf.mxu0
    %v334 = vadd.f32 %v165, %v333
    %v335 = vpop.f32.mrf.mxu0
    %v336 = vadd.f32 %v165, %v335
    %337 = vmatmul.bf16.gmra.mxu0 %v190
    %v338 = vpop.f32.mrf.mxu0
    %v339 = vadd.f32 %v165, %v338
    %v340 = vpop.f32.mrf.mxu0
    %v341 = vadd.f32 %v165, %v340
    %342 = vdwg.mxu0
    %343 = vmatpush.bf16.msra.mxu0 %v292
    %344 = vmatpush.bf16.msra.mxu0 %v291
    %345 = vmatpush.bf16.msra.mxu0 %v290
    %346 = vmatpush.bf16.msra.mxu0 %v289
    %347 = vmatpush.bf16.msra.mxu0 %v288
    %348 = vmatpush.bf16.msra.mxu0 %v287
    %349 = vmatpush.bf16.msra.mxu0 %v286
    %350 = vmatpush.bf16.msra.mxu0 %v285
    %351 = vmatmul.bf16.gmra.mxu0 %v188
    %v352 = vpop.f32.mrf.mxu0
    %v353 = vadd.f32 %v334, %v352
    %v354 = vpop.f32.mrf.mxu0
    %v355 = vadd.f32 %v336, %v354
    %356 = vmatmul.bf16.gmra.mxu0 %v191
    %v357 = vpop.f32.mrf.mxu0
    %v358 = vadd.f32 %v339, %v357
    %v359 = vpop.f32.mrf.mxu0
    %v360 = vadd.f32 %v341, %v359
    %361 = vdwg.mxu0
    %362 = vmatpush.bf16.msra.mxu0 0
    %363 = vmatpush.bf16.msra.mxu0 0
    %364 = vmatpush.bf16.msra.mxu0 0
    %365 = vmatpush.bf16.msra.mxu0 0
    %366 = vmatpush.bf16.msra.mxu0 %v296
    %367 = vmatpush.bf16.msra.mxu0 %v295
    %368 = vmatpush.bf16.msra.mxu0 %v294
    %369 = vmatpush.bf16.msra.mxu0 %v293
    %370 = vmatmul.bf16.gmra.mxu0 %v319
    %v371 = vpop.f32.mrf.mxu0
    %v372 = vadd.f32 %v353, %v371
    %v373 = vpop.f32.mrf.mxu0
    %v374 = vadd.f32 %v355, %v373
    %375 = vmatmul.bf16.gmra.mxu0 %v322
    %v376 = vpop.f32.mrf.mxu0
    %v377 = vadd.f32 %v358, %v376
    %v378 = vpop.f32.mrf.mxu0
    %v379 = vadd.f32 %v360, %v378
    %380 = vdwg.mxu0
    %381 = vst [vmem:[#allocation2] sm:$0x3] 0.0
    %382 = vst [vmem:[#allocation2 + $0x18] sm:$0x3] 0.0
    %383 = vst [vmem:[#allocation2 + $0x12] sm:$0x3] 0.0
    %384 = vst [vmem:[#allocation2 + $0x2a] sm:$0x3] 0.0
    %385 = vst [vmem:[#allocation2 + $0x2] sm:$0xff] %v372
    %386 = vst [vmem:[#allocation2 + $0xa] sm:$0xff] %v374
    %387 = vst [vmem:[#allocation2 + $0x1a] sm:$0xff] %v377
    %388 = vst [vmem:[#allocation2 + $0x22] sm:$0xff] %v379
    %v389 = vld [vmem:[#allocation2] sm:$0xff]
    %v390 = vld [vmem:[#allocation2 + $0x8] sm:$0xff]
    %v391 = vld [vmem:[#allocation2 + $0x18] sm:$0xff]
    %v392 = vld [vmem:[#allocation2 + $0x20] sm:$0xff]
    %v393 = vld [vmem:[#allocation2 + $0x1] sm:$0xff]
    %v394 = vld [vmem:[#allocation2 + $0x9] sm:$0xff]
    %v395 = vld [vmem:[#allocation2 + $0x19] sm:$0xff]
    %v396 = vld [vmem:[#allocation2 + $0x21] sm:$0xff]
    %v397 = vld [vmem:[#allocation2 + $0x2] sm:$0xff]
    %v398 = vld [vmem:[#allocation2 + $0xa] sm:$0xff]
    %v399 = vld [vmem:[#allocation2 + $0x1a] sm:$0xff]
    %v400 = vld [vmem:[#allocation2 + $0x22] sm:$0xff]
    %v401 = vld [vmem:[#allocation2 + $0x3] sm:$0xff]
    %v402 = vld [vmem:[#allocation2 + $0xb] sm:$0xff]
    %v403 = vld [vmem:[#allocation2 + $0x1b] sm:$0xff]
    %v404 = vld [vmem:[#allocation2 + $0x23] sm:$0xff]
    %v405 = vld [vmem:[#allocation2 + $0x4] sm:$0xff]
    %v406 = vld [vmem:[#allocation2 + $0xc] sm:$0xff]
    %v407 = vld [vmem:[#allocation2 + $0x1c] sm:$0xff]
    %v408 = vld [vmem:[#allocation2 + $0x24] sm:$0xff]
    %v409 = vpack.c.bf16 %v390, %v389
    %v410 = vpack.c.bf16 %v394, %v393
    %v411 = vpack.c.bf16 %v398, %v397
    %v412 = vpack.c.bf16 %v402, %v401
    %v413 = vpack.c.bf16 %v406, %v405
    %v414 = vpack.c.bf16 %v392, %v391
    %v415 = vpack.c.bf16 %v396, %v395
    %v416 = vpack.c.bf16 %v400, %v399
    %v417 = vpack.c.bf16 %v404, %v403
    %v418 = vpack.c.bf16 %v408, %v407
    %v419 = vld [vmem:[#allocation8] sm:$0xf]
    %v420 = vld [vmem:[#allocation8 + $0x4] sm:$0xf]
    %v421 = vld [vmem:[#allocation8 + $0x8] sm:$0xf]
    %v422 = vld [vmem:[#allocation8 + $0xc] sm:$0xf]
    %v423 = vld [vmem:[#allocation8 + $0x10] sm:$0xf]
    %v424 = vld [vmem:[#allocation8 + $0x14] sm:$0xf]
    %v425 = vld [vmem:[#allocation8 + $0x18] sm:$0xf]
    %v426 = vld [vmem:[#allocation8 + $0x1c] sm:$0xf]
    %v427 = vld [vmem:[#allocation8 + $0x20] sm:$0xf]
    %v428 = vld [vmem:[#allocation8 + $0x24] sm:$0xf]
    %v429 = vld [vmem:[#allocation8 + $0x28] sm:$0xf]
    %v430 = vld [vmem:[#allocation8 + $0x2c] sm:$0xf]
    %v431 = vld [vmem:[#allocation8 + $0x30] sm:$0xf]
    %v432 = vld [vmem:[#allocation8 + $0x34] sm:$0xf]
    %v433 = vld [vmem:[#allocation8 + $0x38] sm:$0xf]
    %v434 = vld [vmem:[#allocation8 + $0x3c] sm:$0xf]
    %v435 = vld [vmem:[#allocation8 + $0x40] sm:$0xf]
    %v436 = vld [vmem:[#allocation8 + $0x44] sm:$0xf]
    %v437 = vld [vmem:[#allocation8 + $0x48] sm:$0xf]
    %v438 = vld [vmem:[#allocation8 + $0x4c] sm:$0xf]
    %v439 = vld [vmem:[#allocation8 + $0x50] sm:$0xf]
    %v440 = vld [vmem:[#allocation8 + $0x54] sm:$0xf]
    %v441 = vld [vmem:[#allocation8 + $0x58] sm:$0xf]
    %v442 = vld [vmem:[#allocation8 + $0x5c] sm:$0xf]
    %v443 = vld [vmem:[#allocation8 + $0x60] sm:$0xf]
    %v444 = vld [vmem:[#allocation8 + $0x64] sm:$0xf]
    %v445 = vld [vmem:[#allocation8 + $0x68] sm:$0xf]
    %v446 = vld [vmem:[#allocation8 + $0x6c] sm:$0xf]
    %v447 = vld [vmem:[#allocation8 + $0x70] sm:$0xf]
    %v448 = vld [vmem:[#allocation8 + $0x74] sm:$0xf]
    %v449 = vld [vmem:[#allocation8 + $0x78] sm:$0xf]
    %v450 = vld [vmem:[#allocation8 + $0x7c] sm:$0xf]
    %v451 = vld [vmem:[#allocation8 + $0x80] sm:$0xf]
    %v452 = vld [vmem:[#allocation8 + $0x84] sm:$0xf]
    %v453 = vld [vmem:[#allocation8 + $0x88] sm:$0xf]
    %v454 = vld [vmem:[#allocation8 + $0x8c] sm:$0xf]
    %v455 = vld [vmem:[#allocation8 + $0x90] sm:$0xf]
    %v456 = vld [vmem:[#allocation8 + $0x94] sm:$0xf]
    %v457 = vld [vmem:[#allocation8 + $0x98] sm:$0xf]
    %v458 = vld [vmem:[#allocation8 + $0x9c] sm:$0xf]
    %v459 = vld [vmem:[#allocation8 + $0xa0] sm:$0xf]
    %v460 = vld [vmem:[#allocation8 + $0xa4] sm:$0xf]
    %v461 = vld [vmem:[#allocation8 + $0xa8] sm:$0xf]
    %v462 = vld [vmem:[#allocation8 + $0xac] sm:$0xf]
    %v463 = vld [vmem:[#allocation8 + $0xb0] sm:$0xf]
    %v464 = vld [vmem:[#allocation8 + $0xb4] sm:$0xf]
    %v465 = vld [vmem:[#allocation8 + $0xb8] sm:$0xf]
    %v466 = vld [vmem:[#allocation8 + $0xbc] sm:$0xf]
    %v467 = vld [vmem:[#allocation8 + $0xc0] sm:$0xf]
    %v468 = vld [vmem:[#allocation8 + $0xc4] sm:$0xf]
    %v469 = vld [vmem:[#allocation8 + $0xc8] sm:$0xf]
    %v470 = vld [vmem:[#allocation8 + $0xcc] sm:$0xf]
    %v471 = vld [vmem:[#allocation8 + $0xd0] sm:$0xf]
    %v472 = vld [vmem:[#allocation8 + $0xd4] sm:$0xf]
    %v473 = vld [vmem:[#allocation8 + $0xd8] sm:$0xf]
    %v474 = vld [vmem:[#allocation8 + $0xdc] sm:$0xf]
    %v475 = vld [vmem:[#allocation8 + $0xe0] sm:$0xf]
    %v476 = vld [vmem:[#allocation8 + $0xe4] sm:$0xf]
    %v477 = vld [vmem:[#allocation8 + $0xe8] sm:$0xf]
    %v478 = vld [vmem:[#allocation8 + $0xec] sm:$0xf]
    %v479 = vld [vmem:[#allocation8 + $0xf0] sm:$0xf]
    %v480 = vld [vmem:[#allocation8 + $0xf4] sm:$0xf]
    %v481 = vld [vmem:[#allocation8 + $0xf8] sm:$0xf]
    %v482 = vld [vmem:[#allocation8 + $0xfc] sm:$0xf]
    %v483 = vld [vmem:[#allocation8 + $0x100] sm:$0xf]
    %v484 = vld [vmem:[#allocation8 + $0x104] sm:$0xf]
    %v485 = vld [vmem:[#allocation8 + $0x108] sm:$0xf]
    %v486 = vld [vmem:[#allocation8 + $0x10c] sm:$0xf]
    %v487 = vld [vmem:[#allocation8 + $0x110] sm:$0xf]
    %v488 = vld [vmem:[#allocation8 + $0x114] sm:$0xf]
    %v489 = vld [vmem:[#allocation8 + $0x118] sm:$0xf]
    %v490 = vld [vmem:[#allocation8 + $0x11c] sm:$0xf]
    %v491 = vld [vmem:[#allocation8 + $0x120] sm:$0xf]
    %v492 = vld [vmem:[#allocation8 + $0x124] sm:$0xf]
    %v493 = vld [vmem:[#allocation8 + $0x128] sm:$0xf]
    %v494 = vld [vmem:[#allocation8 + $0x12c] sm:$0xf]
    %v495 = vld [vmem:[#allocation8 + $0x130] sm:$0xf]
    %v496 = vld [vmem:[#allocation8 + $0x134] sm:$0xf]
    %v497 = vld [vmem:[#allocation8 + $0x138] sm:$0xf]
    %v498 = vld [vmem:[#allocation8 + $0x13c] sm:$0xf]
    %v499 = vld [vmem:[%s4] sm:$0x1]
    %v501 = vperm.slane %v499, 0
    %v583 = vunpack.c.l.b16 %v419
    %v584 = vunpack.c.l.b16 %v420
    %v585 = vunpack.c.l.b16 %v421
    %v586 = vunpack.c.l.b16 %v422
    %v587 = vunpack.c.l.b16 %v423
    %v588 = vunpack.c.l.b16 %v424
    %v589 = vunpack.c.l.b16 %v425
    %v590 = vunpack.c.l.b16 %v426
    %v591 = vunpack.c.l.b16 %v427
    %v592 = vunpack.c.l.b16 %v428
    %v593 = vunpack.c.l.b16 %v429
    %v594 = vunpack.c.l.b16 %v430
    %v595 = vunpack.c.l.b16 %v431
    %v596 = vunpack.c.l.b16 %v432
    %v597 = vunpack.c.l.b16 %v433
    %v598 = vunpack.c.l.b16 %v434
    %v599 = vunpack.c.l.b16 %v435
    %v600 = vunpack.c.l.b16 %v436
    %v601 = vunpack.c.l.b16 %v437
    %v602 = vunpack.c.l.b16 %v438
    %v603 = vunpack.c.l.b16 %v439
    %v604 = vunpack.c.l.b16 %v440
    %v605 = vunpack.c.l.b16 %v441
    %v606 = vunpack.c.l.b16 %v442
    %v607 = vunpack.c.l.b16 %v443
    %v608 = vunpack.c.l.b16 %v444
    %v609 = vunpack.c.l.b16 %v445
    %v610 = vunpack.c.l.b16 %v446
    %v611 = vunpack.c.l.b16 %v447
    %v612 = vunpack.c.l.b16 %v448
    %v613 = vunpack.c.l.b16 %v449
    %v614 = vunpack.c.l.b16 %v450
    %v615 = vunpack.c.l.b16 %v451
    %v616 = vunpack.c.l.b16 %v452
    %v617 = vunpack.c.l.b16 %v453
    %v618 = vunpack.c.l.b16 %v454
    %v619 = vunpack.c.l.b16 %v455
    %v620 = vunpack.c.l.b16 %v456
    %v621 = vunpack.c.l.b16 %v457
    %v622 = vunpack.c.l.b16 %v458
    %v623 = vunpack.c.l.b16 %v459
    %v624 = vunpack.c.l.b16 %v460
    %v625 = vunpack.c.l.b16 %v461
    %v626 = vunpack.c.l.b16 %v462
    %v627 = vunpack.c.l.b16 %v463
    %v628 = vunpack.c.l.b16 %v464
    %v629 = vunpack.c.l.b16 %v465
    %v630 = vunpack.c.l.b16 %v466
    %v631 = vunpack.c.l.b16 %v467
    %v632 = vunpack.c.l.b16 %v468
    %v633 = vunpack.c.l.b16 %v469
    %v634 = vunpack.c.l.b16 %v470
    %v635 = vunpack.c.l.b16 %v471
    %v636 = vunpack.c.l.b16 %v472
    %v637 = vunpack.c.l.b16 %v473
    %v638 = vunpack.c.l.b16 %v474
    %v639 = vunpack.c.l.b16 %v475
    %v640 = vunpack.c.l.b16 %v476
    %v641 = vunpack.c.l.b16 %v477
    %v642 = vunpack.c.l.b16 %v478
    %v643 = vunpack.c.l.b16 %v479
    %v644 = vunpack.c.l.b16 %v480
    %v645 = vunpack.c.l.b16 %v481
    %v646 = vunpack.c.l.b16 %v482
    %v647 = vunpack.c.l.b16 %v483
    %v648 = vunpack.c.l.b16 %v484
    %v649 = vunpack.c.l.b16 %v485
    %v650 = vunpack.c.l.b16 %v486
    %v651 = vunpack.c.l.b16 %v487
    %v652 = vunpack.c.l.b16 %v488
    %v653 = vunpack.c.l.b16 %v489
    %v654 = vunpack.c.l.b16 %v490
    %v655 = vunpack.c.l.b16 %v491
    %v656 = vunpack.c.l.b16 %v492
    %v657 = vunpack.c.l.b16 %v493
    %v658 = vunpack.c.l.b16 %v494
    %v659 = vunpack.c.l.b16 %v495
    %v660 = vunpack.c.l.b16 %v496
    %v661 = vunpack.c.l.b16 %v497
    %v662 = vunpack.c.l.b16 %v498
    %v663 = vpack.c.b16 %v584, %v583
    %v664 = vpack.c.b16 %v586, %v585
    %v665 = vpack.c.b16 %v588, %v587
    %v666 = vpack.c.b16 %v590, %v589
    %v667 = vpack.c.b16 %v592, %v591
    %v668 = vpack.c.b16 %v594, %v593
    %v669 = vpack.c.b16 %v596, %v595
    %v670 = vpack.c.b16 %v598, %v597
    %v671 = vpack.c.b16 %v600, %v599
    %v672 = vpack.c.b16 %v602, %v601
    %v673 = vpack.c.b16 %v604, %v603
    %v674 = vpack.c.b16 %v606, %v605
    %v675 = vpack.c.b16 %v608, %v607
    %v676 = vpack.c.b16 %v610, %v609
    %v677 = vpack.c.b16 %v612, %v611
    %v678 = vpack.c.b16 %v614, %v613
    %v679 = vpack.c.b16 %v616, %v615
    %v680 = vpack.c.b16 %v618, %v617
    %v681 = vpack.c.b16 %v620, %v619
    %v682 = vpack.c.b16 %v622, %v621
    %v683 = vpack.c.b16 %v624, %v623
    %v684 = vpack.c.b16 %v626, %v625
    %v685 = vpack.c.b16 %v628, %v627
    %v686 = vpack.c.b16 %v630, %v629
    %v687 = vpack.c.b16 %v632, %v631
    %v688 = vpack.c.b16 %v634, %v633
    %v689 = vpack.c.b16 %v636, %v635
    %v690 = vpack.c.b16 %v638, %v637
    %v691 = vpack.c.b16 %v640, %v639
    %v692 = vpack.c.b16 %v642, %v641
    %v693 = vpack.c.b16 %v644, %v643
    %v694 = vpack.c.b16 %v646, %v645
    %v695 = vpack.c.b16 %v648, %v647
    %v696 = vpack.c.b16 %v650, %v649
    %v697 = vpack.c.b16 %v652, %v651
    %v698 = vpack.c.b16 %v654, %v653
    %v699 = vpack.c.b16 %v656, %v655
    %v700 = vpack.c.b16 %v658, %v657
    %v701 = vpack.c.b16 %v660, %v659
    %v702 = vpack.c.b16 %v662, %v661
    %743 = vmatpush.bf16.msra.mxu0 %v670
    %744 = vmatpush.bf16.msra.mxu0 %v669
    %745 = vmatpush.bf16.msra.mxu0 %v668
    %746 = vmatpush.bf16.msra.mxu0 %v667
    %747 = vmatpush.bf16.msra.mxu0 %v666
    %748 = vmatpush.bf16.msra.mxu0 %v665
    %749 = vmatpush.bf16.msra.mxu0 %v664
    %750 = vmatpush.bf16.msra.mxu0 %v663
    %751 = vmatmul.bf16.gmra.mxu0 %v409
    %v752 = vpop.f32.mrf.mxu0
    %v753 = vadd.f32 %v501, %v752
    %v754 = vpop.f32.mrf.mxu0
    %v755 = vadd.f32 %v501, %v754
    %756 = vmatmul.bf16.gmra.mxu0 %v414
    %v757 = vpop.f32.mrf.mxu0
    %v758 = vadd.f32 %v501, %v757
    %v759 = vpop.f32.mrf.mxu0
    %v760 = vadd.f32 %v501, %v759
    %761 = vdwg.mxu0
    %762 = vmatpush.bf16.msra.mxu0 %v678
    %763 = vmatpush.bf16.msra.mxu0 %v677
    %764 = vmatpush.bf16.msra.mxu0 %v676
    %765 = vmatpush.bf16.msra.mxu0 %v675
    %766 = vmatpush.bf16.msra.mxu0 %v674
    %767 = vmatpush.bf16.msra.mxu0 %v673
    %768 = vmatpush.bf16.msra.mxu0 %v672
    %769 = vmatpush.bf16.msra.mxu0 %v671
    %770 = vmatmul.bf16.gmra.mxu0 %v410
    %v771 = vpop.f32.mrf.mxu0
    %v772 = vadd.f32 %v753, %v771
    %v773 = vpop.f32.mrf.mxu0
    %v774 = vadd.f32 %v755, %v773
    %775 = vmatmul.bf16.gmra.mxu0 %v415
    %v776 = vpop.f32.mrf.mxu0
    %v777 = vadd.f32 %v758, %v776
    %v778 = vpop.f32.mrf.mxu0
    %v779 = vadd.f32 %v760, %v778
    %780 = vdwg.mxu0
    %781 = vmatpush.bf16.msra.mxu0 %v686
    %782 = vmatpush.bf16.msra.mxu0 %v685
    %783 = vmatpush.bf16.msra.mxu0 %v684
    %784 = vmatpush.bf16.msra.mxu0 %v683
    %785 = vmatpush.bf16.msra.mxu0 %v682
    %786 = vmatpush.bf16.msra.mxu0 %v681
    %787 = vmatpush.bf16.msra.mxu0 %v680
    %788 = vmatpush.bf16.msra.mxu0 %v679
    %789 = vmatmul.bf16.gmra.mxu0 %v411
    %v790 = vpop.f32.mrf.mxu0
    %v791 = vadd.f32 %v772, %v790
    %v792 = vpop.f32.mrf.mxu0
    %v793 = vadd.f32 %v774, %v792
    %794 = vmatmul.bf16.gmra.mxu0 %v416
    %v795 = vpop.f32.mrf.mxu0
    %v796 = vadd.f32 %v777, %v795
    %v797 = vpop.f32.mrf.mxu0
    %v798 = vadd.f32 %v779, %v797
    %799 = vdwg.mxu0
    %800 = vmatpush.bf16.msra.mxu0 %v694
    %801 = vmatpush.bf16.msra.mxu0 %v693
    %802 = vmatpush.bf16.msra.mxu0 %v692
    %803 = vmatpush.bf16.msra.mxu0 %v691
    %804 = vmatpush.bf16.msra.mxu0 %v690
    %805 = vmatpush.bf16.msra.mxu0 %v689
    %806 = vmatpush.bf16.msra.mxu0 %v688
    %807 = vmatpush.bf16.msra.mxu0 %v687
    %808 = vmatmul.bf16.gmra.mxu0 %v412
    %v809 = vpop.f32.mrf.mxu0
    %v810 = vadd.f32 %v791, %v809
    %v811 = vpop.f32.mrf.mxu0
    %v812 = vadd.f32 %v793, %v811
    %813 = vmatmul.bf16.gmra.mxu0 %v417
    %v814 = vpop.f32.mrf.mxu0
    %v815 = vadd.f32 %v796, %v814
    %v816 = vpop.f32.mrf.mxu0
    %v817 = vadd.f32 %v798, %v816
    %818 = vdwg.mxu0
    %819 = vmatpush.bf16.msra.mxu0 %v702
    %820 = vmatpush.bf16.msra.mxu0 %v701
    %821 = vmatpush.bf16.msra.mxu0 %v700
    %822 = vmatpush.bf16.msra.mxu0 %v699
    %823 = vmatpush.bf16.msra.mxu0 %v698
    %824 = vmatpush.bf16.msra.mxu0 %v697
    %825 = vmatpush.bf16.msra.mxu0 %v696
    %826 = vmatpush.bf16.msra.mxu0 %v695
    %827 = vmatmul.bf16.gmra.mxu0 %v413
    %v828 = vpop.f32.mrf.mxu0
    %v829 = vadd.f32 %v810, %v828
    %v830 = vpop.f32.mrf.mxu0
    %v831 = vadd.f32 %v812, %v830
    %832 = vmatmul.bf16.gmra.mxu0 %v418
    %v833 = vpop.f32.mrf.mxu0
    %v834 = vadd.f32 %v815, %v833
    %v835 = vpop.f32.mrf.mxu0
    %v836 = vadd.f32 %v817, %v835
    %837 = vdwg.mxu0
    %vm838 = vcmp.gt.f32.partialorder %v829, 0.0
    %vm839 = vcmp.gt.f32.partialorder %v831, 0.0
    %vm840 = vcmp.gt.f32.partialorder %v834, 0.0
    %vm841 = vcmp.gt.f32.partialorder %v836, 0.0
    %v842 = vmul.f32 %v829, 1.442695
    %v843 = vpow.pop %v842
    %v844 = vmul.f32 %v831, 1.442695
    %v845 = vpow.pop %v844
    %v846 = vmul.f32 %v834, 1.442695
    %v847 = vpow.pop %v846
    %v848 = vmul.f32 %v836, 1.442695
    %v849 = vpow.pop %v848
    %v850 = vsub.f32 %v843, 1.0
    %v851 = vsub.f32 %v845, 1.0
    %v852 = vsub.f32 %v847, 1.0
    %v853 = vsub.f32 %v849, 1.0
    %v854 = vmul.f32 %v850, 1.6732632
    %v855 = vmul.f32 %v851, 1.6732632
    %v856 = vmul.f32 %v852, 1.6732632
    %v857 = vmul.f32 %v853, 1.6732632
    %v858 = vsel %vm838, %v829, %v854
    %v859 = vsel %vm839, %v831, %v855
    %v860 = vsel %vm840, %v834, %v856
    %v861 = vsel %vm841, %v836, %v857
    %v862 = vmul.f32 %v858, 1.050701
    %v863 = vmul.f32 %v859, 1.050701
    %v864 = vmul.f32 %v860, 1.050701
    %v865 = vmul.f32 %v861, 1.050701
    %vm866 = vcmp.gt.f32.partialorder %v862, 0.0
    %vm867 = vcmp.gt.f32.partialorder %v863, 0.0
    %vm868 = vcmp.gt.f32.partialorder %v864, 0.0
    %vm869 = vcmp.gt.f32.partialorder %v865, 0.0
    %v870 = vmul.f32 %v862, 1.442695
    %v871 = vpow.pop %v870
    %v872 = vmul.f32 %v863, 1.442695
    %v873 = vpow.pop %v872
    %v874 = vmul.f32 %v864, 1.442695
    %v875 = vpow.pop %v874
    %v876 = vmul.f32 %v865, 1.442695
    %v877 = vpow.pop %v876
    %v878 = vsub.f32 %v871, 1.0
    %v879 = vsub.f32 %v873, 1.0
    %v880 = vsub.f32 %v875, 1.0
    %v881 = vsub.f32 %v877, 1.0
    %v882 = vmul.f32 %v878, 1.6732632
    %v883 = vmul.f32 %v879, 1.6732632
    %v884 = vmul.f32 %v880, 1.6732632
    %v885 = vmul.f32 %v881, 1.6732632
    %v886 = vsel %vm866, %v862, %v882
    %v887 = vsel %vm867, %v863, %v883
    %v888 = vsel %vm868, %v864, %v884
    %v889 = vsel %vm869, %v865, %v885
    %v890 = vmul.f32 %v886, 1.050701
    %v891 = vmul.f32 %v887, 1.050701
    %v892 = vmul.f32 %v888, 1.050701
    %v893 = vmul.f32 %v889, 1.050701
    %v894 = vadd.f32 %v890, %v891
    %v895 = vadd.f32 %v894, %v892
    %v896 = vadd.f32 %v895, %v893
    %v897 = vrot.slane %v896, 4
    %v898 = vadd.f32 %v896, %v897
    %v899 = vrot.slane %v898, 2
    %v900 = vadd.f32 %v898, %v899
    %v901 = vrot.slane %v900, 1
    %v902 = vadd.f32 %v900, %v901
    %v903 = vmul.f32 %v890, %v890
    %v904 = vmul.f32 %v891, %v891
    %v905 = vmul.f32 %v892, %v892
    %v906 = vmul.f32 %v893, %v893
    %v907 = vadd.f32 %v903, %v904
    %v908 = vadd.f32 %v907, %v905
    %v909 = vadd.f32 %v908, %v906
    %v910 = vrot.slane %v909, 4
    %v911 = vadd.f32 %v909, %v910
    %v912 = vrot.slane %v911, 2
    %v913 = vadd.f32 %v911, %v912
    %v914 = vrot.slane %v913, 1
    %v915 = vadd.f32 %v913, %v914
    %916 = vrot.lane.b32.xlu0 %v902, 64
    %v917 = vpop.permute.xlu0 %916
    %v918 = vadd.f32 %v902, %v917
    %919 = vrot.lane.b32.xlu0 %v915, 64
    %v920 = vpop.permute.xlu0 %919
    %v921 = vadd.f32 %v915, %v920
    %922 = vrot.lane.b32.xlu0 %v918, 32
    %v923 = vpop.permute.xlu0 %922
    %v924 = vadd.f32 %v918, %v923
    %925 = vrot.lane.b32.xlu0 %v921, 32
    %v926 = vpop.permute.xlu0 %925
    %v927 = vadd.f32 %v921, %v926
    %928 = vrot.lane.b32.xlu0 %v924, 16
    %v929 = vpop.permute.xlu0 %928
    %v930 = vadd.f32 %v924, %v929
    %931 = vrot.lane.b32.xlu0 %v927, 16
    %v932 = vpop.permute.xlu0 %931
    %v933 = vadd.f32 %v927, %v932
    %934 = vrot.lane.b32.xlu0 %v930, 8
    %v935 = vpop.permute.xlu0 %934
    %v936 = vadd.f32 %v930, %v935
    %937 = vrot.lane.b32.xlu0 %v933, 8
    %v938 = vpop.permute.xlu0 %937
    %v939 = vadd.f32 %v933, %v938
    %v940 = vmul.f32 %v936, 0.001953125
    %v941 = vmul.f32 %v939, 0.001953125
    %v942 = vmul.f32 %v940, %v940
    %v943 = vsub.f32 %v941, %v942
    %v944 = vadd.f32 %v943, 1e-05
    %v945 = vrsqrt.pop %v944
    %v946 = vmul.f32 %v945, %v944
    %v947 = vmul.f32 %v946, %v945
    %v948 = vmul.f32 0.5, %v947
    %v949 = vsub.f32 1.5, %v948
    %v950 = vmul.f32 %v945, %v949
    %vm951 = vweird.f32 %v944
    %vm952 = vweird.f32 %v945
    %vm953 = vmor %vm951, %vm952
    %v954 = vsel %vm953, %v945, %v950
    %v955 = vperm.slane %v940, 0
    %v956 = vsub.f32 %v890, %v955
    %v957 = vsub.f32 %v891, %v955
    %v958 = vsub.f32 %v892, %v955
    %v959 = vsub.f32 %v893, %v955
    %v960 = vld [vmem:[%s5] sm:$0x1]
    %v961 = vmul.f32 %v954, %v960
    %v962 = vperm.slane %v961, 0
    %v963 = vmul.f32 %v956, %v962
    %v964 = vmul.f32 %v957, %v962
    %v965 = vmul.f32 %v958, %v962
    %v966 = vmul.f32 %v959, %v962
    %v967 = vld [vmem:[%s6] sm:$0x1]
    %v969 = vperm.slane %v967, 0
    %v971 = vadd.f32 %v963, %v969
    %v972 = vadd.f32 %v964, %v969
    %v973 = vadd.f32 %v965, %v969
    %v974 = vadd.f32 %v966, %v969
    %975 = vst [vmem:[#allocation12] sm:$0xff] %v971
    %976 = vst [vmem:[#allocation12 + $0x8] sm:$0xff] %v972
    %977 = vst [vmem:[#allocation12 + $0x10] sm:$0xff] %v973
    %978 = vst [vmem:[#allocation12 + $0x18] sm:$0xff] %v974
    %v979 = vld [vmem:[#allocation11] sm:$0xff]
    %v980 = vld [vmem:[#allocation11 + $0x8] sm:$0xff]
    %v981 = vld [vmem:[#allocation11 + $0x10] sm:$0xff]
    %v982 = vld [vmem:[#allocation11 + $0x18] sm:$0xff]
    %vm983 = vcmask 261120
    %v985 = vsel %vm983, %v979, 0
    %v988 = vsel %vm983, %v980, 0
    %v991 = vsel %vm983, %v981, 0
    %v994 = vsel %vm983, %v982, 0
    %996 = vmatpush.msra.mxu0 0.0
    %997 = vmatpush.msra.mxu0 0.0
    %998 = vmatpush.msra.mxu0 0.0
    %999 = vmatpush.msra.mxu0 0.0
    %1000 = vmatpush.msra.mxu0 0.0
    %1001 = vmatpush.msra.mxu0 0.0
    %1002 = vmatpush.msra.mxu0 0.0
    %1003 = vmatpush.msra.mxu0 0.0
    %1004 = vmatpush.msra.mxu0 0.0
    %1005 = vmatpush.msra.mxu0 0.0
    %1006 = vmatpush.msra.mxu0 0.0
    %1007 = vmatpush.msra.mxu0 0.0
    %1008 = vmatpush.msra.mxu0 %v974
    %1009 = vmatpush.msra.mxu0 %v973
    %1010 = vmatpush.msra.mxu0 %v972
    %1011 = vmatpush.msra.mxu0 %v971
    %1012 = vmatmul.f32.gmra.mxu0 %v985
    %v1013 = vpop.f32.mrf.mxu0
    %v1014 = vadd.f32 0.0, %v1013
    %1015 = vmatmul.f32.gmra.mxu0 %v988
    %v1016 = vpop.f32.mrf.mxu0
    %v1017 = vadd.f32 0.0, %v1016
    %1018 = vmatmul.f32.gmra.mxu0 %v991
    %v1019 = vpop.f32.mrf.mxu0
    %v1020 = vadd.f32 0.0, %v1019
    %1021 = vmatmul.f32.gmra.mxu0 %v994
    %v1022 = vpop.f32.mrf.mxu0
    %v1023 = vadd.f32 0.0, %v1022
    %1024 = vdwg.mxu0
    %v1025 = vmax.f32 %v1014, %v1020
    %v1026 = vmax.f32 %v1017, %v1023
    %v1027 = vld [vmem:[#allocation9] sm:$0xff]
    %v1028 = vld [vmem:[#allocation9 + $0x8] sm:$0xff]
    %v1029 = vld [vmem:[#allocation9 + $0x10] sm:$0xff]
    %v1030 = vld [vmem:[#allocation9 + $0x18] sm:$0xff]
    %v1031 = vld [vmem:[#allocation9 + $0x20] sm:$0xff]
    %v1032 = vld [vmem:[#allocation9 + $0x28] sm:$0xff]
    %v1033 = vld [vmem:[#allocation9 + $0x30] sm:$0xff]
    %v1034 = vld [vmem:[#allocation9 + $0x38] sm:$0xff]
    %v1035 = vld [vmem:[#allocation9 + $0x40] sm:$0xff]
    %v1036 = vld [vmem:[#allocation9 + $0x48] sm:$0xff]
    %v1037 = vld [vmem:[#allocation9 + $0x50] sm:$0xff]
    %v1038 = vld [vmem:[#allocation9 + $0x58] sm:$0xff]
    %v1039 = vld [vmem:[#allocation9 + $0x60] sm:$0xff]
    %v1040 = vld [vmem:[#allocation9 + $0x68] sm:$0xff]
    %v1041 = vld [vmem:[#allocation9 + $0x70] sm:$0xff]
    %v1042 = vld [vmem:[#allocation9 + $0x78] sm:$0xff]
    %1043 = vmatpush.msra.mxu0 %v1042
    %1044 = vmatpush.msra.mxu0 %v1041
    %1045 = vmatpush.msra.mxu0 %v1040
    %1046 = vmatpush.msra.mxu0 %v1039
    %1047 = vmatpush.msra.mxu0 %v1038
    %1048 = vmatpush.msra.mxu0 %v1037
    %1049 = vmatpush.msra.mxu0 %v1036
    %1050 = vmatpush.msra.mxu0 %v1035
    %1051 = vmatpush.msra.mxu0 %v1034
    %1052 = vmatpush.msra.mxu0 %v1033
    %1053 = vmatpush.msra.mxu0 %v1032
    %1054 = vmatpush.msra.mxu0 %v1031
    %1055 = vmatpush.msra.mxu0 %v1030
    %1056 = vmatpush.msra.mxu0 %v1029
    %1057 = vmatpush.msra.mxu0 %v1028
    %1058 = vmatpush.msra.mxu0 %v1027
    %1059 = vmatmul.f32.gmra.mxu0 %v1025
    %v1060 = vpop.f32.mrf.mxu0
    %v1061 = vadd.f32 0.0, %v1060
    %1062 = vmatmul.f32.gmra.mxu0 %v1026
    %v1063 = vpop.f32.mrf.mxu0
    %v1064 = vadd.f32 0.0, %v1063
    %1065 = vdwg.mxu0
    %1066 = vrot.lane.b32.xlu0 %v1061, 64
    %v1067 = vpop.permute.xlu0 %1066
    %1068 = vrot.lane.b32.xlu0 %v1064, 64
    %v1069 = vpop.permute.xlu0 %1068
    %v1070 = vmax.f32 %v1061, %v1067
    %v1071 = vmax.f32 %v1064, %v1069
    %1072 = vst [vmem:[#allocation13] sm:$0xff] %v1070
    %1073 = vst [vmem:[#allocation13 + $0x8] sm:$0xff] %v1071
    // Predicated region
    $region58: #{tpu_custom_call.1} parent=1 // pred_check
      _
    $region59: #{tpu_custom_call.1} parent=1 // pred_check_branch
      %1075 = sbr.rel (0) target = $region61
    $region60: #{tpu_custom_call.1} parent=1 // pred_region
      %1077 = vsyncadd [#allocation5], 0
      %s1078 = sshll.u32 [#allocation12], 4
      %s1079 = int_to_ptr.vmem [resolvable:$true] %s1078
      %s1080 = sshll.u32 %s9, 4
      %s1081 = int_to_ptr.hbm [resolvable:$true] %s1080
      %1086 = dma.vmem_to_hbm [thread:$0]  %s1079, 512, %s1081, [#allocation5], 128, 128, 8
    $region61: #{tpu_custom_call.1} parent=1 // pred_fallthru
      _
    // Predicated region
    $region62: #{tpu_custom_call.1} parent=1 // pred_check
      _
    $region63: #{tpu_custom_call.1} parent=1 // pred_check_branch
      %1088 = sbr.rel (0) target = $region65
    $region64: #{tpu_custom_call.1} parent=1 // pred_region
      %1090 = vsyncadd [#allocation14], 0
      %s1091 = sshll.u32 [#allocation13], 4
      %s1092 = int_to_ptr.vmem [resolvable:$true] %s1091
      %s1093 = sshll.u32 %s10, 4
      %s1094 = int_to_ptr.hbm [resolvable:$true] %s1093
      %1099 = dma.vmem_to_hbm [thread:$0]  %s1092, 256, %s1094, [#allocation14], 128, 128, 8
    $region65: #{tpu_custom_call.1} parent=1 // pred_fallthru
      _
    // Predicated region
    $region66: #{tpu_custom_call.1} parent=1 // pred_check
      _
    $region67: #{tpu_custom_call.1} parent=1 // pred_check_branch
      %1101 = sbr.rel (0) target = $region69
    $region68: #{tpu_custom_call.1} parent=1 // pred_region
      %1103 = dma.done [#allocation5], 512
    $region69: #{tpu_custom_call.1} parent=1 // pred_fallthru
      _
    // Predicated region
    $region70: #{tpu_custom_call.1} parent=1 // pred_check
      _
    $region71: #{tpu_custom_call.1} parent=1 // pred_check_branch
      %1105 = sbr.rel (0) target = $region73
    $region72: #{tpu_custom_call.1} parent=1 // pred_region
      %1107 = dma.done [#allocation14], 256
    $region73: #{tpu_custom_call.1} parent=1 // pred_fallthru
      _
    %1108 = vsyncpa [#allocation4], 1
    %1109 = vsyncpa [#allocation7], 1
    %1110 = vsyncpa [#allocation10], 1
    %1111 = vsyncpa [#allocation5], 1
    %1112 = vsyncpa [#allocation14], 1

</llo_original>
